<compile_context>
chip_gen: v5e
topology: v5e:2x2
jax: 0.10.0
libtpu: 0.0.40
codegen_flags: <defaults>
</compile_context>

<pallas_src>
import functools

import jax
import jax.numpy as jnp
from jax.experimental import pallas as pl
from jax.experimental.pallas import tpu as pltpu


def _round_up(x: int, m: int) -> int:
    return ((x + m - 1) // m) * m


def _sgc_linear_kernel(x_ref, w_ref, b_ref, o_ref, acc_ref):
    # x_ref:   [TILE_M, TILE_K]   row tile of node features (K block)
    # w_ref:   [TILE_K, C_PAD]    pre-transposed, lane-padded weight block
    # b_ref:   [1, C_PAD]         lane-padded bias (resident)
    # o_ref:   [TILE_M, C_PAD]    lane-dense output tile
    # acc_ref: [TILE_M, C_PAD]    f32 accumulator scratch
    k = pl.program_id(1)

    @pl.when(k == 0)
    def _():
        acc_ref[...] = jnp.zeros_like(acc_ref)

    acc_ref[...] += jnp.dot(
        x_ref[...], w_ref[...], preferred_element_type=jnp.float32
    )

    @pl.when(k == pl.num_programs(1) - 1)
    def _():
        o_ref[...] = (acc_ref[...] + b_ref[...]).astype(o_ref.dtype)


@functools.partial(jax.jit, static_argnames=("tile_m",))
def sgc_forward(x, weight, bias, *, tile_m: int = 512):
    """SGC forward: x @ weight.T + bias.

    x:      [N, nfeat]
    weight: [nclass, nfeat]   (PyTorch nn.Linear layout)
    bias:   [nclass]
    returns [N, nclass]
    """
    n, nfeat = x.shape
    nclass = weight.shape[0]
    itemsize = 4  # f32 everywhere

    # --- lane-dense class dimension (pad to a multiple of 128) -------------
    c_pad = _round_up(max(nclass, 1), 128)

    # --- K (feature) tiling: one block when small, 512-wide blocks when big
    k_pad_128 = _round_up(max(nfeat, 1), 128)
    if k_pad_128 <= 1024:
        tk = k_pad_128
    else:
        tk = 512
    k_pad = _round_up(max(nfeat, 1), tk)
    grid_k = k_pad // tk
    w_buffers = 1 if grid_k == 1 else 2  # resident vs. double-buffered weight

    # --- row tiling: cap so grid_m >= 2 (>= 4 when N allows) ---------------
    tm = max(8, min(tile_m, _round_up(pl.cdiv(n, 4), 8)))

    # --- VMEM budget (per grid step, incl. Mosaic internal scratch) --------
    vmem_cap = 48 * 1024 * 1024   # safe on v7x's 64 MiB per-TC VMEM
    default_scoped = 32 * 1024 * 1024

    def _per_step_bytes(tm_):
        return (
            2 * tm_ * tk * itemsize          # double-buffered x tile
            + 2 * tm_ * c_pad * itemsize     # double-buffered output tile
            + w_buffers * tk * c_pad * itemsize
            + c_pad * itemsize               # bias
            + tm_ * c_pad * itemsize         # accumulator scratch
            + 2 * 1024 * 1024                # Mosaic internal scratch allowance
        )

    while _per_step_bytes(tm) > vmem_cap and tm > 8:
        tm = max(8, _round_up(tm // 2, 8))

    n_pad = _round_up(n, tm)
    grid_m = n_pad // tm
    needed = _per_step_bytes(tm)

    compiler_kwargs = dict(dimension_semantics=("parallel", "arbitrary"))
    if needed > default_scoped:
        compiler_kwargs["vmem_limit_bytes"] = min(int(needed * 1.1), vmem_cap)

    # --- pad operands (zeros contribute nothing to the matmul) -------------
    if (n_pad, k_pad) != (n, nfeat):
        x_in = jnp.zeros((n_pad, k_pad), dtype=x.dtype).at[:n, :nfeat].set(x)
    else:
        x_in = x
    # Pre-transposed weight: [k_pad, c_pad], paid once in XLA, not per step.
    w_t = (
        jnp.zeros((k_pad, c_pad), dtype=weight.dtype)
        .at[:nfeat, :nclass]
        .set(weight.T)
    )
    b_pad = jnp.zeros((1, c_pad), dtype=bias.dtype).at[0, :nclass].set(bias)

    # --- BlockSpecs ---------------------------------------------------------
    x_spec = pl.BlockSpec((tm, tk), lambda i, k: (i, k))
    if grid_k == 1:
        # Constant index_map -> never re-DMAs; single-buffer to save VMEM.
        w_spec = pl.BlockSpec(
            (tk, c_pad), lambda i, k: (0, 0), pipeline_mode=pl.Buffered(1)
        )
    else:
        w_spec = pl.BlockSpec((tk, c_pad), lambda i, k: (k, 0))
    b_spec = pl.BlockSpec(
        (1, c_pad), lambda i, k: (0, 0), pipeline_mode=pl.Buffered(1)
    )
    o_spec = pl.BlockSpec((tm, c_pad), lambda i, k: (i, 0))

    cost = pl.CostEstimate(
        flops=2 * n_pad * k_pad * c_pad,
        transcendentals=0,
        bytes_accessed=(
            n_pad * k_pad * itemsize
            + k_pad * c_pad * itemsize
            + c_pad * itemsize
            + n_pad * c_pad * itemsize
        ),
    )

    out_pad = pl.pallas_call(
        _sgc_linear_kernel,
        out_shape=jax.ShapeDtypeStruct((n_pad, c_pad), x.dtype),
        grid_spec=pltpu.PrefetchScalarGridSpec(
            num_scalar_prefetch=0,
            grid=(grid_m, grid_k),
            in_specs=[x_spec, w_spec, b_spec],
            out_specs=o_spec,
            scratch_shapes=[pltpu.VMEM((tm, c_pad), jnp.float32)],
        ),
        compiler_params=pltpu.CompilerParams(**compiler_kwargs),
        cost_estimate=cost,
    )(x_in, w_t, b_pad)

    # Slice away row / lane padding (cheap layout ops in XLA).
    return out_pad[:n, :nclass]


if __name__ == "__main__":
    # Small shapes consistent with the module: N nodes, nfeat features, nclass classes.
    N, NFEAT, NCLASS = 16, 32, 8

    key = jax.random.PRNGKey(0)
    kx, kw, kb, kw2, kb2 = jax.random.split(key, 5)

    # Deterministic synthetic parameters (shapes follow nn.Linear(nfeat, nclass)).
    x = jax.random.normal(kx, (N, NFEAT), dtype=jnp.float32)
    W_weight = jax.random.normal(kw, (NCLASS, NFEAT), dtype=jnp.float32) * 0.1
    W_bias = jax.random.normal(kb, (NCLASS,), dtype=jnp.float32) * 0.1
    # W2 exists in __init__ but is unused in forward; materialize for fidelity.
    W2_weight = jax.random.normal(kw2, (NFEAT, NFEAT), dtype=jnp.float32) * 0.1
    W2_bias = jax.random.normal(kb2, (NFEAT,), dtype=jnp.float32) * 0.1

    out = sgc_forward(x, W_weight, W_bias)
    out = jax.block_until_ready(out)

    # Reference check against plain JAX (same semantics as PyTorch Linear).
    ref = x @ W_weight.T + W_bias
    assert out.shape == (N, NCLASS)
    assert jnp.allclose(out, ref, atol=1e-5, rtol=1e-5)

    print("KERNEL_OK")
</pallas_src>

<mosaic_0001>
module attributes {stable_mosaic.version = 11 : i64} {
  func.func @_sgc_linear_kernel(%arg0: i32, %arg1: i32, %arg2: memref<8x128xf32, #tpu.memory_space<vmem>>, %arg3: memref<128x128xf32, #tpu.memory_space<vmem>>, %arg4: memref<1x128xf32, #tpu.memory_space<vmem>>, %arg5: memref<8x128xf32, #tpu.memory_space<vmem>>, %arg6: memref<8x128xf32, #tpu.memory_space<vmem>>) attributes {dimension_semantics = [#tpu.dimension_semantics<parallel>, #tpu.dimension_semantics<arbitrary>], iteration_bounds = array<i64: 2, 1>, scalar_prefetch = 0 : i64, scratch_operands = 1 : i64, tpu.core_type = #tpu.core_type<tc>, window_params = [{transform_indices = @transform_0, window_bounds = array<i64: 8, 128>}, {pipeline_mode = #tpu.pipeline_mode<synchronous>, transform_indices = @transform_1, window_bounds = array<i64: 128, 128>}, {pipeline_mode = #tpu.pipeline_mode<synchronous>, transform_indices = @transform_2, window_bounds = array<i64: 1, 128>}, {transform_indices = @transform_3, window_bounds = array<i64: 8, 128>}]} {
    %c0_i32 = arith.constant 0 : i32
    %0 = arith.cmpi eq, %arg1, %c0_i32 : i32
    %1 = arith.extui %0 : i1 to i32
    %c0_i32_0 = arith.constant 0 : i32
    %2 = arith.cmpi ne, %1, %c0_i32_0 : i32
    scf.if %2 {
      %cst_10 = arith.constant 0.000000e+00 : f32
      %12 = vector.broadcast %cst_10 : f32 to vector<8x128xf32>
      %c0_11 = arith.constant 0 : index
      %c0_12 = arith.constant 0 : index
      %13 = vector.load %arg6[%c0_11, %c0_12] : memref<8x128xf32, #tpu.memory_space<vmem>>, vector<8x128xf32>
      tpu.vector_store %arg6[%c0_11, %c0_12], %12 {strides = array<i32>} : memref<8x128xf32, #tpu.memory_space<vmem>>, vector<8x128xf32>,
    } else {
    }
    %c0 = arith.constant 0 : index
    %c0_1 = arith.constant 0 : index
    %3 = vector.load %arg6[%c0, %c0_1] : memref<8x128xf32, #tpu.memory_space<vmem>>, vector<8x128xf32>
    %c0_2 = arith.constant 0 : index
    %c0_3 = arith.constant 0 : index
    %4 = vector.load %arg2[%c0_2, %c0_3] : memref<8x128xf32, #tpu.memory_space<vmem>>, vector<8x128xf32>
    %c0_4 = arith.constant 0 : index
    %c0_5 = arith.constant 0 : index
    %5 = vector.load %arg3[%c0_4, %c0_5] : memref<128x128xf32, #tpu.memory_space<vmem>>, vector<128x128xf32>
    %cst = arith.constant dense<0.000000e+00> : vector<8x128xf32>
    %6 = tpu.matmul %4, %5, %cst {dimension_numbers = #tpu.dot_dimension_numbers<[1], [0], [0], [1], [0, 0, 1, 1], [], []>} : vector<8x128xf32>, vector<128x128xf32>, vector<8x128xf32> -> vector<8x128xf32>
    %7 = arith.addf %3, %6 : vector<8x128xf32>
    %c0_6 = arith.constant 0 : index
    %c0_7 = arith.constant 0 : index
    %8 = vector.load %arg6[%c0_6, %c0_7] : memref<8x128xf32, #tpu.memory_space<vmem>>, vector<8x128xf32>
    tpu.vector_store %arg6[%c0_6, %c0_7], %7 {strides = array<i32>} : memref<8x128xf32, #tpu.memory_space<vmem>>, vector<8x128xf32>,
    %c0_i32_8 = arith.constant 0 : i32
    %9 = arith.cmpi eq, %arg1, %c0_i32_8 : i32
    %10 = arith.extui %9 : i1 to i32
    %c0_i32_9 = arith.constant 0 : i32
    %11 = arith.cmpi ne, %10, %c0_i32_9 : i32
    scf.if %11 {
      %c0_10 = arith.constant 0 : index
      %c0_11 = arith.constant 0 : index
      %12 = vector.load %arg6[%c0_10, %c0_11] : memref<8x128xf32, #tpu.memory_space<vmem>>, vector<8x128xf32>
      %c0_12 = arith.constant 0 : index
      %c0_13 = arith.constant 0 : index
      %13 = vector.load %arg4[%c0_12, %c0_13] : memref<1x128xf32, #tpu.memory_space<vmem>>, vector<1x128xf32>
      %14 = vector.broadcast %13 : vector<1x128xf32> to vector<8x128xf32>
      %15 = arith.addf %12, %14 : vector<8x128xf32>
      %c0_14 = arith.constant 0 : index
      %c0_15 = arith.constant 0 : index
      %16 = vector.load %arg5[%c0_14, %c0_15] : memref<8x128xf32, #tpu.memory_space<vmem>>, vector<8x128xf32>
      tpu.vector_store %arg5[%c0_14, %c0_15], %15 {strides = array<i32>} : memref<8x128xf32, #tpu.memory_space<vmem>>, vector<8x128xf32>,
    } else {
    }
    return
  }
  func.func @transform_0(%arg0: i32, %arg1: i32) -> (i32, i32) {
    %c0_i32 = arith.constant 0 : i32
    return %arg0, %arg1 : i32, i32
  }
  func.func @transform_1(%arg0: i32, %arg1: i32) -> (i32, i32) {
    %c0_i32 = arith.constant 0 : i32
    %c0_i32_0 = arith.constant 0 : i32
    %c0_i32_1 = arith.constant 0 : i32
    return %c0_i32, %c0_i32_0 : i32, i32
  }
  func.func @transform_2(%arg0: i32, %arg1: i32) -> (i32, i32) {
    %c0_i32 = arith.constant 0 : i32
    %c0_i32_0 = arith.constant 0 : i32
    %c0_i32_1 = arith.constant 0 : i32
    return %c0_i32, %c0_i32_0 : i32, i32
  }
  func.func @transform_3(%arg0: i32, %arg1: i32) -> (i32, i32) {
    %c0_i32 = arith.constant 0 : i32
    %c0_i32_0 = arith.constant 0 : i32
    return %arg0, %c0_i32 : i32, i32
  }
}

</mosaic_0001>

<llo_original>
// kernel: sgc_forward.1
$region0: #{sgc_forward.1}
  #allocation0 [shape = 'u32[]', space=smem, size = 0x4, offset = 0x4, fixed_abs, tag = 'smem constant byte address 0x4 - core index']
  #allocation1 [shape = 'u32[72,128]{1,0:T(1,128)}', space=vmem, size = 0x9000, scoped, tag = 'internal scratch']
  #allocation2 [shape = 'f32[8,128]{1,0:T(8,128)}', space=vmem, size = 0x1000, scoped, tag = 'scratch operand']
  %s0 = inlined_call_operand.vmem [shape: f32[16,128], index: 0, kind: input, shape index: {}]
  %s1 = inlined_call_operand.vmem [shape: f32[128,128], index: 1, kind: input, shape index: {}]
  %s2 = inlined_call_operand.vmem [shape: f32[1,128], index: 2, kind: input, shape index: {}]
  %s3 = inlined_call_operand.vmem [shape: f32[16,128], index: 3, kind: output, shape index: {}]
  %s4 = sld [smem:[#allocation0]]
  $region53: #{sgc_forward.1} parent=0
    _
  %s6 = ssub.s32 1, %s4
  %s7 = scalar_select 0, %s6, %s4
  loop: start=0, step=1, limit=4
  $region2: #{sgc_forward.1} parent=0 // loop_pre_header
    _
  $region3: #{sgc_forward.1} parent=0 // loop_header
    %s9 = sphi 0, %s13
    %p10 = scmp.ge.s32.totalorder %s9, 4
    %s16 = sphi 0, %s28
    %s17 = sphi 0, %s24
    %s18 = sphi 0, %s16
    %s19 = sphi 0, %s17
    %s20 = sphi 0, %s18
    %s21 = sphi 0, %s19
    %s33 = sphi 0, %s35
    %s36 = sphi 0, %s33
    %s37 = sphi 0, %s36
    %s53 = sphi 0, %s37
    %s57 = sphi 0, %s57
    %s59 = sphi 0, %s57
    %s60 = sphi 0, %s59
    %s74 = sphi 0, %s60
    %s78 = sphi 0, %s78
    %s80 = sphi 0, %s78
    %s81 = sphi 0, %s80
    %s95 = sphi 0, %s81
    %s101 = sphi 0, %s103
    %s104 = sphi 0, %s101
    %s105 = sphi 0, %s104
    %s121 = sphi 0, %s105
  $region4: #{sgc_forward.1} parent=0 // loop_header_branch
    %12 = sbr.rel (%p10) target = $region8
  $region5: #{sgc_forward.1} parent=0 // loop_body
    %s14 = ssub.s32 %s9, 1
    %s15 = ssub.s32 %s9, 2
    %s22 = sadd.s32 1, %s17
    %p23 = scmp.ge.s32.totalorder %s22, 1
    %s24 = scalar_select %p23, 0, %s22
    %s25 = sadd.s32 1, %s16
    %s26 = scalar_select %p23, %s25, %s16
    %p27 = scmp.ge.s32.totalorder %s26, 2
    %s28 = scalar_select %p27, 0, %s26
    %s29 = ssub.s32 %s16, %s28
    %s30 = ssub.s32 %s17, %s24
    %s31 = sor.u32 %s29, %s30
    %p32 = scmp.eq.s32.totalorder %s31, 0
    %s34 = sadd.s32 %s33, 1
    %s35 = scalar_select %p32, %s33, %s34
    %p38 = pneg %p32
    %p39 = scmp.eq.s32.totalorder %s9, 1
    %p40 = por %p38, %p39
    %p41 = scmp.ne.s32.totalorder %s33, %s36
    %p42 = scmp.eq.s32.totalorder %s9, 0
    %p43 = por %p41, %p42
    %p44 = scmp.ne.s32.totalorder %s33, %s36
    %p45 = scmp.eq.s32.totalorder %s14, 1
    %p46 = por %p44, %p45
    %p47 = scmp.ne.s32.totalorder %s36, %s37
    %p48 = scmp.eq.s32.totalorder %s14, 0
    %p49 = por %p47, %p48
    %p50 = scmp.ne.s32.totalorder %s36, %s37
    %p51 = scmp.eq.s32.totalorder %s15, 1
    %p52 = por %p50, %p51
    %p54 = scmp.ne.s32.totalorder %s37, %s53
    %p55 = scmp.eq.s32.totalorder %s15, 0
    %p56 = por %p54, %p55
    %s58 = sadd.s32 %s57, 1
    %p61 = scmp.eq.s32.totalorder %s9, 1
    %p62 = scmp.ne.s32.totalorder %s57, %s59
    %p63 = scmp.eq.s32.totalorder %s9, 0
    %p64 = por %p62, %p63
    %p65 = scmp.ne.s32.totalorder %s57, %s59
    %p66 = scmp.eq.s32.totalorder %s14, 1
    %p67 = por %p65, %p66
    %p68 = scmp.ne.s32.totalorder %s59, %s60
    %p69 = scmp.eq.s32.totalorder %s14, 0
    %p70 = por %p68, %p69
    %p71 = scmp.ne.s32.totalorder %s59, %s60
    %p72 = scmp.eq.s32.totalorder %s15, 1
    %p73 = por %p71, %p72
    %p75 = scmp.ne.s32.totalorder %s60, %s74
    %p76 = scmp.eq.s32.totalorder %s15, 0
    %p77 = por %p75, %p76
    %s79 = sadd.s32 %s78, 1
    %p82 = scmp.eq.s32.totalorder %s9, 1
    %p83 = scmp.ne.s32.totalorder %s78, %s80
    %p84 = scmp.eq.s32.totalorder %s9, 0
    %p85 = por %p83, %p84
    %p86 = scmp.ne.s32.totalorder %s78, %s80
    %p87 = scmp.eq.s32.totalorder %s14, 1
    %p88 = por %p86, %p87
    %p89 = scmp.ne.s32.totalorder %s80, %s81
    %p90 = scmp.eq.s32.totalorder %s14, 0
    %p91 = por %p89, %p90
    %p92 = scmp.ne.s32.totalorder %s80, %s81
    %p93 = scmp.eq.s32.totalorder %s15, 1
    %p94 = por %p92, %p93
    %p96 = scmp.ne.s32.totalorder %s81, %s95
    %p97 = scmp.eq.s32.totalorder %s15, 0
    %p98 = por %p96, %p97
    %s99 = ssub.s32 %s16, %s28
    %p100 = scmp.eq.s32.totalorder %s99, 0
    %s102 = sadd.s32 %s101, 1
    %s103 = scalar_select %p100, %s101, %s102
    %p106 = pneg %p100
    %p107 = scmp.eq.s32.totalorder %s9, 1
    %p108 = por %p106, %p107
    %p109 = scmp.ne.s32.totalorder %s101, %s104
    %p110 = scmp.eq.s32.totalorder %s9, 0
    %p111 = por %p109, %p110
    %p112 = scmp.ne.s32.totalorder %s101, %s104
    %p113 = scmp.eq.s32.totalorder %s14, 1
    %p114 = por %p112, %p113
    %p115 = scmp.ne.s32.totalorder %s104, %s105
    %p116 = scmp.eq.s32.totalorder %s14, 0
    %p117 = por %p115, %p116
    %p118 = scmp.ne.s32.totalorder %s104, %s105
    %p119 = scmp.eq.s32.totalorder %s15, 1
    %p120 = por %p118, %p119
    %p122 = scmp.ne.s32.totalorder %s105, %s121
    %p123 = scmp.eq.s32.totalorder %s15, 0
    %p124 = por %p122, %p123
    %p125 = scmp.le.s32.totalorder 1, %s9
    %p126 = scmp.lt.s32.totalorder %s9, 3
    %p127 = pnand %p125, %p126
    %p128 = pneg %p127
    // Predicated region
    $region9: #{sgc_forward.1} parent=5 // pred_check
      _
    $region10: #{sgc_forward.1} parent=5 // pred_check_branch
      %130 = sbr.rel (%p127) target = $region12
    $region11: #{sgc_forward.1} parent=5 // pred_region
      %s131 = ssub.s32 %s9, 1
      // Predicated region
      $region13: #{sgc_forward.1} parent=11 // pred_check
        %p132 = pneg %p70
      $region14: #{sgc_forward.1} parent=11 // pred_check_branch
        %134 = sbr.rel (%p132) target = $region16
      $region15: #{sgc_forward.1} parent=11 // pred_region
        _
      $region16: #{sgc_forward.1} parent=11 // pred_fallthru
        _
      // Predicated region
      $region17: #{sgc_forward.1} parent=11 // pred_check
        %p135 = pneg %p91
      $region18: #{sgc_forward.1} parent=11 // pred_check_branch
        %137 = sbr.rel (%p135) target = $region20
      $region19: #{sgc_forward.1} parent=11 // pred_region
        _
      $region20: #{sgc_forward.1} parent=11 // pred_fallthru
        _
    $region12: #{sgc_forward.1} parent=5 // pred_fallthru
      _
    %p138 = scmp.lt.s32.totalorder %s9, 2
    // Predicated region
    $region21: #{sgc_forward.1} parent=5 // pred_check
      %p139 = pneg %p138
    $region22: #{sgc_forward.1} parent=5 // pred_check_branch
      %141 = sbr.rel (%p139) target = $region24
    $region23: #{sgc_forward.1} parent=5 // pred_region
      // Predicated region
      $region25: #{sgc_forward.1} parent=23 // pred_check
        %p142 = pneg %p43
      $region26: #{sgc_forward.1} parent=23 // pred_check_branch
        %144 = sbr.rel (%p142) target = $region28
      $region27: #{sgc_forward.1} parent=23 // pred_region
        %p145 = scmp.lt.s32.totalorder %s16, 1
        %s146 = scalar_select %p145, %s16, 1
        %p147 = scmp.lt.s32.totalorder %s17, 0
        %s148 = scalar_select %p147, %s17, 0
        %s149 = sadd.s32 %s148, %s146
        %s150 = smul.addr %s149, 8
        %s151 = scalar_lea.vmem %s0, %s150
      $region28: #{sgc_forward.1} parent=23 // pred_fallthru
        _
    $region24: #{sgc_forward.1} parent=5 // pred_fallthru
      _
    %p152 = scmp.le.s32.totalorder 1, %s9
    %p153 = scmp.lt.s32.totalorder %s9, 3
    %p154 = pnand %p152, %p153
    %p155 = pneg %p154
    // Predicated region
    $region29: #{sgc_forward.1} parent=5 // pred_check
      _
    $region30: #{sgc_forward.1} parent=5 // pred_check_branch
      %157 = sbr.rel (%p154) target = $region32
    $region31: #{sgc_forward.1} parent=5 // pred_region
      %s158 = ssub.s32 %s9, 1
      %p159 = scmp.lt.s32.totalorder %s18, 1
      %s160 = scalar_select %p159, %s18, 1
      %p161 = scmp.lt.s32.totalorder %s19, 0
      %s162 = scalar_select %p161, %s19, 0
      %s163 = sadd.s32 %s162, %s160
      %s164 = smul.addr %s163, 8
      %s165 = scalar_lea.vmem %s0, %s164
      %p166 = pneg %p49
      %p167 = pneg %p46
      %p168 = pneg %p70
      %p169 = pneg %p67
      %p170 = pneg %p91
      %p171 = pneg %p88
      %p172 = pneg %p117
      %p173 = pneg %p114
      %p174 = scmp.lt.s32.totalorder %s18, 1
      %s175 = scalar_select %p174, %s18, 1
      %s176 = smul.addr %s175, 8
      %s177 = scalar_lea.vmem %s3, %s176
      %p178 = scmp.lt.s32.totalorder %s18, 1
      %s179 = scalar_select %p178, %s18, 1
      %p180 = scmp.lt.s32.totalorder %s19, 0
      %s181 = scalar_select %p180, %s19, 0
      %s182 = sadd.s32 %s181, %s179
      %s183 = smul.addr %s182, 8
      %s184 = scalar_lea.vmem %s0, %s183
      %p185 = scmp.lt.s32.totalorder %s18, 1
      %s186 = scalar_select %p185, %s18, 1
      %s187 = smul.addr %s186, 8
      %s188 = scalar_lea.vmem %s3, %s187
      %p189 = scmp.eq.s32.totalorder %s19, 0
      // Predicated region
      $region33: #{sgc_forward.1} parent=31 // pred_check
        %p190 = pneg %p189
      $region34: #{sgc_forward.1} parent=31 // pred_check_branch
        %192 = sbr.rel (%p190) target = $region36
      $region35: #{sgc_forward.1} parent=31 // pred_region
        %193 = vst [vmem:[#allocation2] sm:$0xff] 0.0
      $region36: #{sgc_forward.1} parent=31 // pred_fallthru
        _
      %v194 = vld [vmem:[#allocation2] sm:$0xff]
      %v195 = vld [vmem:[%s184] sm:$0xff]
      %v196 = vld [vmem:[%s1] sm:$0xff]
      %v197 = vld [vmem:[%s1 + $0x8] sm:$0xff]
      %v198 = vld [vmem:[%s1 + $0x10] sm:$0xff]
      %v199 = vld [vmem:[%s1 + $0x18] sm:$0xff]
      %v200 = vld [vmem:[%s1 + $0x20] sm:$0xff]
      %v201 = vld [vmem:[%s1 + $0x28] sm:$0xff]
      %v202 = vld [vmem:[%s1 + $0x30] sm:$0xff]
      %v203 = vld [vmem:[%s1 + $0x38] sm:$0xff]
      %v204 = vld [vmem:[%s1 + $0x40] sm:$0xff]
      %v205 = vld [vmem:[%s1 + $0x48] sm:$0xff]
      %v206 = vld [vmem:[%s1 + $0x50] sm:$0xff]
      %v207 = vld [vmem:[%s1 + $0x58] sm:$0xff]
      %v208 = vld [vmem:[%s1 + $0x60] sm:$0xff]
      %v209 = vld [vmem:[%s1 + $0x68] sm:$0xff]
      %v210 = vld [vmem:[%s1 + $0x70] sm:$0xff]
      %v211 = vld [vmem:[%s1 + $0x78] sm:$0xff]
      %212 = vmatpush.msra.mxu0 %v211
      %213 = vmatpush.msra.mxu0 %v210
      %214 = vmatpush.msra.mxu0 %v209
      %215 = vmatpush.msra.mxu0 %v208
      %216 = vmatpush.msra.mxu0 %v207
      %217 = vmatpush.msra.mxu0 %v206
      %218 = vmatpush.msra.mxu0 %v205
      %219 = vmatpush.msra.mxu0 %v204
      %220 = vmatpush.msra.mxu0 %v203
      %221 = vmatpush.msra.mxu0 %v202
      %222 = vmatpush.msra.mxu0 %v201
      %223 = vmatpush.msra.mxu0 %v200
      %224 = vmatpush.msra.mxu0 %v199
      %225 = vmatpush.msra.mxu0 %v198
      %226 = vmatpush.msra.mxu0 %v197
      %227 = vmatpush.msra.mxu0 %v196
      %228 = vmatmul.f32.gmra.mxu0 %v195
      %v229 = vpop.f32.mrf.mxu0
      %v230 = vadd.f32 0.0, %v229
      %231 = vdwg.mxu0
      %v232 = vadd.f32 %v194, %v230
      %233 = vst [vmem:[#allocation2] sm:$0xff] %v232
      // Predicated region
      $region37: #{sgc_forward.1} parent=31 // pred_check
        %p234 = pneg %p189
      $region38: #{sgc_forward.1} parent=31 // pred_check_branch
        %236 = sbr.rel (%p234) target = $region40
      $region39: #{sgc_forward.1} parent=31 // pred_region
        %v237 = vld [vmem:[#allocation2] sm:$0xff]
        %v238 = vld [vmem:[%s2] sm:$0x1]
        %v240 = vperm.slane %v238, 0
        %v242 = vadd.f32 %v237, %v240
        %243 = vst [vmem:[%s188] sm:$0xff] %v242
      $region40: #{sgc_forward.1} parent=31 // pred_fallthru
        _
      %p244 = scmp.lt.s32.totalorder %s18, 1
      %s245 = scalar_select %p244, %s18, 1
      %s246 = smul.addr %s245, 8
      %s247 = scalar_lea.vmem %s3, %s246
      // Predicated region
      $region41: #{sgc_forward.1} parent=31 // pred_check
        %p248 = pneg %p114
      $region42: #{sgc_forward.1} parent=31 // pred_check_branch
        %250 = sbr.rel (%p248) target = $region44
      $region43: #{sgc_forward.1} parent=31 // pred_region
        _
      $region44: #{sgc_forward.1} parent=31 // pred_fallthru
        _
    $region32: #{sgc_forward.1} parent=5 // pred_fallthru
      _
    %p251 = scmp.le.s32.totalorder 2, %s9
    // Predicated region
    $region45: #{sgc_forward.1} parent=5 // pred_check
      %p252 = pneg %p251
    $region46: #{sgc_forward.1} parent=5 // pred_check_branch
      %254 = sbr.rel (%p252) target = $region48
    $region47: #{sgc_forward.1} parent=5 // pred_region
      %s255 = ssub.s32 %s9, 2
      // Predicated region
      $region49: #{sgc_forward.1} parent=47 // pred_check
        %p256 = pneg %p120
      $region50: #{sgc_forward.1} parent=47 // pred_check_branch
        %258 = sbr.rel (%p256) target = $region52
      $region51: #{sgc_forward.1} parent=47 // pred_region
        %p259 = scmp.lt.s32.totalorder %s20, 1
        %s260 = scalar_select %p259, %s20, 1
        %s261 = smul.addr %s260, 8
        %s262 = scalar_lea.vmem %s3, %s261
      $region52: #{sgc_forward.1} parent=47 // pred_fallthru
        _
    $region48: #{sgc_forward.1} parent=5 // pred_fallthru
      _
  $region6: #{sgc_forward.1} parent=0 // loop_footer
    %s13 = sadd.s32 1, %s9
  $region7: #{sgc_forward.1} parent=0 // loop_footer_branch
    %8 = sbr.rel target = $region3
  $region8: #{sgc_forward.1} parent=0 // loop_exit
    _

</llo_original>
